<compile_context>
chip_gen: v7x
topology: tpu7x:2x2x1
jax: 0.10.0
libtpu: 0.0.40
codegen_flags: <defaults>
</compile_context>

<pallas_src>
import jax
import jax.numpy as jnp
from jax import lax
from jax.experimental import pallas as pl
from jax.experimental.pallas import tpu as pltpu


def softplus(x):
    return jnp.logaddexp(x, 0.0)


def inv_softplus(x):
    return jnp.log(jnp.expm1(x))


def quad_exp_ard_kernel(x_ref, y_ref, alpha2_ref, inv_ell_x_ref, inv_ell_y_ref,
                        o_ref):
    # x_ref:         (BN, TM, d)   x tile, mx on sublanes, d on lanes
    # y_ref:         (BN, d, TN)   y tile, my on lanes
    # alpha2_ref:    (BN, 1, 1)    alpha[n]^2
    # inv_ell_x_ref: (BN, 1, d)    1 / ell[n, :]
    # inv_ell_y_ref: (BN, d, 1)    1 / ell[n, :]
    # o_ref:         (BN, TM, TN)
    xs = x_ref[...].astype(jnp.float32) * inv_ell_x_ref[...]   # (BN, TM, d)
    ys = y_ref[...].astype(jnp.float32) * inv_ell_y_ref[...]   # (BN, d, TN)

    # cross[b, i, j] = sum_d xs[b, i, d] * ys[b, d, j]   (batched MXU matmul)
    cross = lax.dot_general(
        xs, ys, (((2,), (1,)), ((0,), (0,))),
        preferred_element_type=jnp.float32)                    # (BN, TM, TN)

    xn = jnp.sum(xs * xs, axis=2, keepdims=True)               # (BN, TM, 1)
    yn = jnp.sum(ys * ys, axis=1, keepdims=True)               # (BN, 1, TN)

    # -0.5 * ||(x_i - y_j) / ell||^2, clamped at 0: the norm expansion can go
    # slightly positive from cancellation when x_i ~= y_j; K must stay <= a^2.
    arg = jnp.minimum(cross - 0.5 * xn - 0.5 * yn, 0.0)
    o_ref[...] = (alpha2_ref[...] * jnp.exp(arg)).astype(o_ref.dtype)


def _largest_divisor_leq(x, cap):
    for c in range(min(x, cap), 0, -1):
        if x % c == 0:
            return c
    return 1


def _padded_f32_bytes(rows, cols):
    # VMEM footprint of an f32 (rows, cols) tile padded to (8, 128) granules.
    return (-(-rows // 8) * 8) * (-(-cols // 128) * 128) * 4


def _choose_tiles(n, d, mx, my):
    # TM (output sublane dim): multiple of 8 when tiled, else full.
    TM = mx
    if mx > 512:
        for c in (512, 256, 128, 64, 32, 16, 8):
            if mx % c == 0:
                TM = c
                break
    # TN (output lane dim): multiple of 128 when tiled; keep it lane-dense.
    TN = my
    if my > 1024:
        for c in (1024, 512, 256, 128):
            if my % c == 0:
                TN = c
                break
    # For small (mx, my), batch several n per grid step to amortize per-step
    # grid overhead; keep the per-buffer footprint ~<= 4 MiB so the
    # double-buffered working set fits every generation's scoped default.
    BN = 1
    if TM == mx and TN == my:
        per_n = (_padded_f32_bytes(TM, d) + _padded_f32_bytes(d, TN)
                 + _padded_f32_bytes(TM, TN))
        BN = _largest_divisor_leq(n, max(1, (4 << 20) // per_n))
    return BN, TM, TN


def quad_exp_ard(x, y, alpha, ell, *, out_dtype=jnp.float32,
                 block_b=None, block_m=None, block_n=None):
    """x: (n, d, mx), y: (n, d, my), alpha: (n,), ell: (n, d) -> (n, mx, my)."""
    n, d, mx = x.shape
    my = y.shape[-1]

    # Tiny parameter tensors, folded host-side into broadcast-ready shapes.
    alpha2 = jnp.square(alpha.astype(jnp.float32)).reshape(n, 1, 1)
    inv_ell = 1.0 / ell.astype(jnp.float32)
    inv_ell_x = inv_ell.reshape(n, 1, d)
    inv_ell_y = inv_ell.reshape(n, d, 1)

    # Layout plumbing: put mx on the sublane axis of the x tiles.
    x_t = jnp.swapaxes(x, -1, -2)                                # (n, mx, d)

    BN, TM, TN = _choose_tiles(n, d, mx, my)
    if block_b is not None:
        BN = block_b
    if block_m is not None:
        TM = block_m
    if block_n is not None:
        TN = block_n
    assert n % BN == 0 and mx % TM == 0 and my % TN == 0, (BN, TM, TN)

    grid = (n // BN, mx // TM, my // TN)
    return pl.pallas_call(
        quad_exp_ard_kernel,
        out_shape=jax.ShapeDtypeStruct((n, mx, my), out_dtype),
        grid=grid,
        in_specs=[
            pl.BlockSpec((BN, TM, d), lambda b, i, j: (b, i, 0)),
            pl.BlockSpec((BN, d, TN), lambda b, i, j: (b, 0, j)),
            pl.BlockSpec((BN, 1, 1), lambda b, i, j: (b, 0, 0)),
            pl.BlockSpec((BN, 1, d), lambda b, i, j: (b, 0, 0)),
            pl.BlockSpec((BN, d, 1), lambda b, i, j: (b, 0, 0)),
        ],
        out_specs=pl.BlockSpec((BN, TM, TN), lambda b, i, j: (b, i, j)),
        compiler_params=pltpu.CompilerParams(
            dimension_semantics=("parallel", "parallel", "parallel")),
    )(x_t, y, alpha2, inv_ell_x, inv_ell_y)


def quad_exp_ard_reference(x, y, alpha, ell):
    # Exact broadcast form of the PyTorch module (for verification).
    diff = x[:, :, :, None] - y[:, :, None, :]            # (n, d, mx, my)
    ard_distance = diff * diff
    sqr_ell = jnp.square(ell)[..., None, None]            # (n, d, 1, 1)
    sqr_alpha = jnp.square(alpha)[:, None, None]          # (n, 1, 1)
    return sqr_alpha * jnp.exp(-0.5 * (ard_distance / sqr_ell).sum(-3))


if __name__ == "__main__":
    key = jax.random.PRNGKey(0)

    def make_inputs(key, n, d, mx, my):
        kx, ky, kell = jax.random.split(key, 3)
        # QuadExpARD.__init__: alpha raw = inv_softplus(ones) -> alpha = 1,
        #                      ell raw = softplus(randn(n, d)) -> ell = softplus(raw)
        alpha = softplus(inv_softplus(jnp.ones((n,), dtype=jnp.float32)))
        ell = softplus(softplus(jax.random.normal(kell, (n, d), dtype=jnp.float32)))
        x = jax.random.normal(kx, (n, d, mx), dtype=jnp.float32)
        y = jax.random.normal(ky, (n, d, my), dtype=jnp.float32)
        return x, y, alpha, ell

    k1, k2 = jax.random.split(key)

    # 1) Tiny case (mx = my = 16): several n are batched into one grid step.
    x, y, alpha, ell = make_inputs(k1, n=4, d=3, mx=16, my=16)
    out = jax.block_until_ready(quad_exp_ard(x, y, alpha, ell))
    ref = quad_exp_ard_reference(x, y, alpha, ell)
    assert out.shape == ref.shape
    assert jnp.allclose(out, ref, rtol=1e-3, atol=2e-4), "tiny case mismatch"

    # 1b) Reduced-precision output path (compute f32, cast on store).
    out_bf16 = jax.block_until_ready(
        quad_exp_ard(x, y, alpha, ell, out_dtype=jnp.bfloat16))
    assert jnp.allclose(out_bf16.astype(jnp.float32), ref,
                        rtol=2e-2, atol=1e-2), "bf16 output mismatch"

    # 2) Multi-tile case: exercise the (n, mx, my) tiling path at small shapes.
    x2, y2, alpha_2, ell_2 = make_inputs(k2, n=2, d=3, mx=64, my=256)
    out2 = jax.block_until_ready(
        quad_exp_ard(x2, y2, alpha_2, ell_2,
                     block_b=1, block_m=32, block_n=128))
    ref2 = quad_exp_ard_reference(x2, y2, alpha_2, ell_2)
    assert jnp.allclose(out2, ref2, rtol=1e-3, atol=2e-4), "tiled case mismatch"

    print("KERNEL_OK")
</pallas_src>

<mosaic_0001>
module attributes {stable_mosaic.version = 11 : i64} {
  func.func @quad_exp_ard_kernel(%arg0: i32, %arg1: i32, %arg2: i32, %arg3: memref<4x16x3xf32, #tpu.memory_space<vmem>>, %arg4: memref<4x3x16xf32, #tpu.memory_space<vmem>>, %arg5: memref<4x1x1xf32, #tpu.memory_space<vmem>>, %arg6: memref<4x1x3xf32, #tpu.memory_space<vmem>>, %arg7: memref<4x3x1xf32, #tpu.memory_space<vmem>>, %arg8: memref<4x16x16xf32, #tpu.memory_space<vmem>>) attributes {dimension_semantics = [#tpu.dimension_semantics<parallel>, #tpu.dimension_semantics<parallel>, #tpu.dimension_semantics<parallel>], iteration_bounds = array<i64: 1, 1, 1>, scalar_prefetch = 0 : i64, scratch_operands = 0 : i64, tpu.core_type = #tpu.core_type<tc>, window_params = [{transform_indices = @transform_0, window_bounds = array<i64: 4, 16, 3>}, {transform_indices = @transform_1, window_bounds = array<i64: 4, 3, 16>}, {transform_indices = @transform_2, window_bounds = array<i64: 4, 1, 1>}, {transform_indices = @transform_3, window_bounds = array<i64: 4, 1, 3>}, {transform_indices = @transform_4, window_bounds = array<i64: 4, 3, 1>}, {transform_indices = @transform_5, window_bounds = array<i64: 4, 16, 16>}]} {
    %c0 = arith.constant 0 : index
    %c0_0 = arith.constant 0 : index
    %c0_1 = arith.constant 0 : index
    %0 = vector.load %arg3[%c0, %c0_0, %c0_1] : memref<4x16x3xf32, #tpu.memory_space<vmem>>, vector<4x16x3xf32>
    %c0_2 = arith.constant 0 : index
    %c0_3 = arith.constant 0 : index
    %c0_4 = arith.constant 0 : index
    %1 = vector.load %arg6[%c0_2, %c0_3, %c0_4] : memref<4x1x3xf32, #tpu.memory_space<vmem>>, vector<4x1x3xf32>
    %2 = vector.broadcast %1 : vector<4x1x3xf32> to vector<4x16x3xf32>
    %3 = arith.mulf %0, %2 : vector<4x16x3xf32>
    %c0_5 = arith.constant 0 : index
    %c0_6 = arith.constant 0 : index
    %c0_7 = arith.constant 0 : index
    %4 = vector.load %arg4[%c0_5, %c0_6, %c0_7] : memref<4x3x16xf32, #tpu.memory_space<vmem>>, vector<4x3x16xf32>
    %c0_8 = arith.constant 0 : index
    %c0_9 = arith.constant 0 : index
    %c0_10 = arith.constant 0 : index
    %5 = vector.load %arg7[%c0_8, %c0_9, %c0_10] : memref<4x3x1xf32, #tpu.memory_space<vmem>>, vector<4x3x1xf32>
    %6 = vector.broadcast %5 : vector<4x3x1xf32> to vector<4x3x16xf32>
    %7 = arith.mulf %4, %6 : vector<4x3x16xf32>
    %cst = arith.constant dense<0.000000e+00> : vector<4x16x16xf32>
    %8 = tpu.matmul %3, %7, %cst {dimension_numbers = #tpu.dot_dimension_numbers<[2], [1], [1], [2], [0, 0, 0, 1, 1, 2], [0], [0]>} : vector<4x16x3xf32>, vector<4x3x16xf32>, vector<4x16x16xf32> -> vector<4x16x16xf32>
    %9 = arith.mulf %3, %3 : vector<4x16x3xf32>
    %cst_11 = arith.constant dense<0.000000e+00> : vector<4x16xf32>
    %10 = vector.multi_reduction <add>, %9, %cst_11 [2] : vector<4x16x3xf32> to vector<4x16xf32>
    %11 = vector.shape_cast %10 : vector<4x16xf32> to vector<4x16x1xf32>
    %12 = arith.mulf %7, %7 : vector<4x3x16xf32>
    %cst_12 = arith.constant dense<0.000000e+00> : vector<4x16xf32>
    %13 = vector.multi_reduction <add>, %12, %cst_12 [1] : vector<4x3x16xf32> to vector<4x16xf32>
    %14 = vector.shape_cast %13 : vector<4x16xf32> to vector<4x1x16xf32>
    %cst_13 = arith.constant 5.000000e-01 : f32
    %15 = vector.broadcast %cst_13 : f32 to vector<4x16x1xf32>
    %16 = arith.mulf %15, %11 : vector<4x16x1xf32>
    %17 = vector.broadcast %16 : vector<4x16x1xf32> to vector<4x16x16xf32>
    %18 = arith.subf %8, %17 : vector<4x16x16xf32>
    %cst_14 = arith.constant 5.000000e-01 : f32
    %19 = vector.broadcast %cst_14 : f32 to vector<4x1x16xf32>
    %20 = arith.mulf %19, %14 : vector<4x1x16xf32>
    %21 = vector.broadcast %20 : vector<4x1x16xf32> to vector<4x16x16xf32>
    %22 = arith.subf %18, %21 : vector<4x16x16xf32>
    %cst_15 = arith.constant 0.000000e+00 : f32
    %23 = vector.broadcast %cst_15 : f32 to vector<4x16x16xf32>
    %24 = arith.minimumf %22, %23 : vector<4x16x16xf32>
    %c0_16 = arith.constant 0 : index
    %c0_17 = arith.constant 0 : index
    %c0_18 = arith.constant 0 : index
    %25 = vector.load %arg5[%c0_16, %c0_17, %c0_18] : memref<4x1x1xf32, #tpu.memory_space<vmem>>, vector<4x1x1xf32>
    %26 = math.exp %24 : vector<4x16x16xf32>
    %27 = vector.broadcast %25 : vector<4x1x1xf32> to vector<4x16x16xf32>
    %28 = arith.mulf %27, %26 : vector<4x16x16xf32>
    %c0_19 = arith.constant 0 : index
    %c0_20 = arith.constant 0 : index
    %c0_21 = arith.constant 0 : index
    %29 = vector.load %arg8[%c0_19, %c0_20, %c0_21] : memref<4x16x16xf32, #tpu.memory_space<vmem>>, vector<4x16x16xf32>
    tpu.vector_store %arg8[%c0_19, %c0_20, %c0_21], %28 {strides = array<i32>} : memref<4x16x16xf32, #tpu.memory_space<vmem>>, vector<4x16x16xf32>,
    return
  }
  func.func @transform_0(%arg0: i32, %arg1: i32, %arg2: i32) -> (i32, i32, i32) {
    %c0_i32 = arith.constant 0 : i32
    %c0_i32_0 = arith.constant 0 : i32
    return %arg0, %arg1, %c0_i32 : i32, i32, i32
  }
  func.func @transform_1(%arg0: i32, %arg1: i32, %arg2: i32) -> (i32, i32, i32) {
    %c0_i32 = arith.constant 0 : i32
    %c0_i32_0 = arith.constant 0 : i32
    return %arg0, %c0_i32, %arg2 : i32, i32, i32
  }
  func.func @transform_2(%arg0: i32, %arg1: i32, %arg2: i32) -> (i32, i32, i32) {
    %c0_i32 = arith.constant 0 : i32
    %c0_i32_0 = arith.constant 0 : i32
    %c0_i32_1 = arith.constant 0 : i32
    return %arg0, %c0_i32, %c0_i32_0 : i32, i32, i32
  }
  func.func @transform_3(%arg0: i32, %arg1: i32, %arg2: i32) -> (i32, i32, i32) {
    %c0_i32 = arith.constant 0 : i32
    %c0_i32_0 = arith.constant 0 : i32
    %c0_i32_1 = arith.constant 0 : i32
    return %arg0, %c0_i32, %c0_i32_0 : i32, i32, i32
  }
  func.func @transform_4(%arg0: i32, %arg1: i32, %arg2: i32) -> (i32, i32, i32) {
    %c0_i32 = arith.constant 0 : i32
    %c0_i32_0 = arith.constant 0 : i32
    %c0_i32_1 = arith.constant 0 : i32
    return %arg0, %c0_i32, %c0_i32_0 : i32, i32, i32
  }
  func.func @transform_5(%arg0: i32, %arg1: i32, %arg2: i32) -> (i32, i32, i32) {
    %c0_i32 = arith.constant 0 : i32
    return %arg0, %arg1, %arg2 : i32, i32, i32
  }
}

</mosaic_0001>

<llo_original>
// kernel: tpu_custom_call.1
$region0: #{tpu_custom_call.1}
  #allocation0 [shape = 'u32[]', space=smem, size = 0x4, offset = 0x4, fixed_abs, tag = 'smem constant byte address 0x4 - core index']
  #allocation1 [shape = 'u32[144,128]{1,0:T(1,128)}', space=vmem, size = 0x12000, scoped, tag = 'internal scratch']
  %s0 = inlined_call_operand.vmem [shape: f32[4,16,3], index: 0, kind: input, shape index: {}]
  %s1 = inlined_call_operand.vmem [shape: f32[4,3,16], index: 1, kind: input, shape index: {}]
  %s2 = inlined_call_operand.vmem [shape: f32[4,1,1], index: 2, kind: input, shape index: {}]
  %s3 = inlined_call_operand.vmem [shape: f32[4,1,3], index: 3, kind: input, shape index: {}]
  %s4 = inlined_call_operand.vmem [shape: f32[4,3,1], index: 4, kind: input, shape index: {}]
  %s5 = inlined_call_operand.hbm [shape: f32[4,16,16], index: 5, kind: output, shape index: {}]
  %s6 = sld [smem:[#allocation0]]
  $region30: #{tpu_custom_call.1} parent=0
    _
  %s8 = ssub.s32 1, %s6
  %s9 = scalar_select 0, %s8, %s6
  $region1: #{tpu_custom_call.1} parent=0
    #allocation2 [shape = 'u8[32768]{0}', space=vmem, size = 0x8000, scoped, tag = 'output window, operand 0, single buffered']
    #allocation3 [shape = 's32[1]{0}', space=sflag, size = 0x4, scoped, tag = 'scoped memory for tpu_custom_call.1']
    %10 = vsyncpa [#allocation3], 0
    // Predicated region
    $region2: #{tpu_custom_call.1} parent=1 // pred_check
      _
    $region3: #{tpu_custom_call.1} parent=1 // pred_check_branch
      %12 = sbr.rel (0) target = $region5
    $region4: #{tpu_custom_call.1} parent=1 // pred_region
      _
    $region5: #{tpu_custom_call.1} parent=1 // pred_fallthru
      _
    // Predicated region
    $region6: #{tpu_custom_call.1} parent=1 // pred_check
      _
    $region7: #{tpu_custom_call.1} parent=1 // pred_check_branch
      %14 = sbr.rel (0) target = $region9
    $region8: #{tpu_custom_call.1} parent=1 // pred_region
      _
    $region9: #{tpu_custom_call.1} parent=1 // pred_fallthru
      _
    // Predicated region
    $region10: #{tpu_custom_call.1} parent=1 // pred_check
      _
    $region11: #{tpu_custom_call.1} parent=1 // pred_check_branch
      %16 = sbr.rel (0) target = $region13
    $region12: #{tpu_custom_call.1} parent=1 // pred_region
      _
    $region13: #{tpu_custom_call.1} parent=1 // pred_fallthru
      _
    // Predicated region
    $region14: #{tpu_custom_call.1} parent=1 // pred_check
      _
    $region15: #{tpu_custom_call.1} parent=1 // pred_check_branch
      %18 = sbr.rel (0) target = $region17
    $region16: #{tpu_custom_call.1} parent=1 // pred_region
      _
    $region17: #{tpu_custom_call.1} parent=1 // pred_fallthru
      _
    // Predicated region
    $region18: #{tpu_custom_call.1} parent=1 // pred_check
      _
    $region19: #{tpu_custom_call.1} parent=1 // pred_check_branch
      %20 = sbr.rel (0) target = $region21
    $region20: #{tpu_custom_call.1} parent=1 // pred_region
      _
    $region21: #{tpu_custom_call.1} parent=1 // pred_fallthru
      _
    %v21 = vld [vmem:[%s0] sm:$0xff]
    %v22 = vld [vmem:[%s0 + $0x8] sm:$0xff]
    %v23 = vld [vmem:[%s0 + $0x10] sm:$0xff]
    %v24 = vld [vmem:[%s0 + $0x18] sm:$0xff]
    %v25 = vld [vmem:[%s0 + $0x20] sm:$0xff]
    %v26 = vld [vmem:[%s0 + $0x28] sm:$0xff]
    %v27 = vld [vmem:[%s0 + $0x30] sm:$0xff]
    %v28 = vld [vmem:[%s0 + $0x38] sm:$0xff]
    %v29 = vld [vmem:[%s3] sm:$0x1]
    %v30 = vld [vmem:[%s3 + $0x1] sm:$0x1]
    %v31 = vld [vmem:[%s3 + $0x2] sm:$0x1]
    %v32 = vld [vmem:[%s3 + $0x3] sm:$0x1]
    %v37 = vlaneseq
    %v38 = vshrl.u32 %v37, 7
    %v39 = vsub.s32 0, %v38
    %v40 = vrot.slane %v29, %v39
    %v41 = vlaneseq
    %v42 = vshrl.u32 %v41, 7
    %v43 = vsub.s32 0, %v42
    %v44 = vrot.slane %v30, %v43
    %v45 = vlaneseq
    %v46 = vshrl.u32 %v45, 7
    %v47 = vsub.s32 0, %v46
    %v48 = vrot.slane %v31, %v47
    %v49 = vlaneseq
    %v50 = vshrl.u32 %v49, 7
    %v51 = vsub.s32 0, %v50
    %v52 = vrot.slane %v32, %v51
    %v57 = vmul.f32 %v21, %v40
    %v58 = vmul.f32 %v22, %v40
    %v59 = vmul.f32 %v23, %v44
    %v60 = vmul.f32 %v24, %v44
    %v61 = vmul.f32 %v25, %v48
    %v62 = vmul.f32 %v26, %v48
    %v63 = vmul.f32 %v27, %v52
    %v64 = vmul.f32 %v28, %v52
    %v65 = vld [vmem:[%s1] sm:$0x7]
    %v66 = vld [vmem:[%s1 + $0x4] sm:$0x7]
    %v67 = vld [vmem:[%s1 + $0x8] sm:$0x7]
    %v68 = vld [vmem:[%s1 + $0xc] sm:$0x7]
    %v69 = vld [vmem:[%s4] sm:$0x7]
    %v70 = vld [vmem:[%s4 + $0x4] sm:$0x7]
    %v71 = vld [vmem:[%s4 + $0x8] sm:$0x7]
    %v72 = vld [vmem:[%s4 + $0xc] sm:$0x7]
    %74 = vset.pattern.permute.xlu0 0
    %75 = vperm.xlu0 %74, %v69
    %v76 = vpop.permute.xlu0 %75
    %79 = vset.pattern.permute.xlu0 0
    %80 = vperm.xlu0 %79, %v70
    %v81 = vpop.permute.xlu0 %80
    %84 = vset.pattern.permute.xlu0 0
    %85 = vperm.xlu0 %84, %v71
    %v86 = vpop.permute.xlu0 %85
    %89 = vset.pattern.permute.xlu0 0
    %90 = vperm.xlu0 %89, %v72
    %v91 = vpop.permute.xlu0 %90
    %v93 = vmul.f32 %v65, %v76
    %v94 = vmul.f32 %v66, %v81
    %v95 = vmul.f32 %v67, %v86
    %v96 = vmul.f32 %v68, %v91
    %vm97 = vcmask 23552
    %v99 = vsel %vm97, %v57, 0
    %v102 = vsel %vm97, %v58, 0
    %vm104 = vcmask 1042432
    %v106 = vsel %vm104, %v93, 0
    %108 = vmatprep.subr.mxu0 0.0
    %109 = vmatpush1.msra.mxu0 %v106
    %110 = vmatprep.subr.mxu0 0.0
    %111 = vmatpush1.msra.mxu0 0.0
    %112 = vmatprep.subr.mxu0 0.0
    %113 = vmatpush1.msra.mxu0 0.0
    %114 = vmatprep.subr.mxu0 0.0
    %115 = vmatpush1.msra.mxu0 0.0
    %116 = vmatprep.subr.mxu0 0.0
    %117 = vmatpush1.msra.mxu0 0.0
    %118 = vmatprep.subr.mxu0 0.0
    %119 = vmatpush1.msra.mxu0 0.0
    %120 = vmatprep.subr.mxu0 0.0
    %121 = vmatpush1.msra.mxu0 0.0
    %122 = vmatprep.subr.mxu0 0.0
    %123 = vmatpush1.msra.mxu0 0.0
    %124 = vmatprep.subr.mxu0 0.0
    %125 = vmatpush1.msra.mxu0 0.0
    %126 = vmatprep.subr.mxu0 0.0
    %127 = vmatpush1.msra.mxu0 0.0
    %128 = vmatprep.subr.mxu0 0.0
    %129 = vmatpush1.msra.mxu0 0.0
    %130 = vmatprep.subr.mxu0 0.0
    %131 = vmatpush1.msra.mxu0 0.0
    %132 = vmatprep.subr.mxu0 0.0
    %133 = vmatpush1.msra.mxu0 0.0
    %134 = vmatprep.subr.mxu0 0.0
    %135 = vmatpush1.msra.mxu0 0.0
    %136 = vmatprep.subr.mxu0 0.0
    %137 = vmatpush1.msra.mxu0 0.0
    %138 = vmatprep.subr.mxu0 0.0
    %139 = vmatpush1.msra.mxu0 0.0
    %140 = vmatprep.subr.mxu0 0.0
    %141 = vmatpush1.msra.mxu0 0.0
    %142 = vmatprep.subr.mxu0 0.0
    %143 = vmatpush1.msra.mxu0 0.0
    %144 = vmatprep.subr.mxu0 0.0
    %145 = vmatpush1.msra.mxu0 0.0
    %146 = vmatprep.subr.mxu0 0.0
    %147 = vmatpush1.msra.mxu0 0.0
    %148 = vmatprep.subr.mxu0 0.0
    %149 = vmatpush1.msra.mxu0 0.0
    %150 = vmatprep.subr.mxu0 0.0
    %151 = vmatpush1.msra.mxu0 0.0
    %152 = vmatprep.subr.mxu0 0.0
    %153 = vmatpush1.msra.mxu0 0.0
    %154 = vmatprep.subr.mxu0 0.0
    %155 = vmatpush1.msra.mxu0 0.0
    %156 = vmatprep.subr.mxu0 0.0
    %157 = vmatpush1.msra.mxu0 0.0
    %158 = vmatprep.subr.mxu0 0.0
    %159 = vmatpush1.msra.mxu0 0.0
    %160 = vmatprep.subr.mxu0 0.0
    %161 = vmatpush1.msra.mxu0 0.0
    %162 = vmatprep.subr.mxu0 0.0
    %163 = vmatpush1.msra.mxu0 0.0
    %164 = vmatprep.subr.mxu0 0.0
    %165 = vmatpush1.msra.mxu0 0.0
    %166 = vmatprep.subr.mxu0 0.0
    %167 = vmatpush1.msra.mxu0 0.0
    %168 = vmatprep.subr.mxu0 0.0
    %169 = vmatpush1.msra.mxu0 0.0
    %170 = vmatprep.subr.mxu0 0.0
    %171 = vmatpush1.msra.mxu0 0.0
    %172 = vmatprep.mubr.f32.mxu0 0.0
    %173 = vmatmul.mubr.f32.gmra.mrb[0].mxu0 %v99
    %v174 = vpop.f32.mrb[0].mxu0
    %v175 = vadd.f32 0.0, %v174
    %v176 = vpop.f32.mrb[0].mxu0
    %177 = vmatprep.mubr.f32.mxu0 0.0
    %178 = vmatmul.mubr.f32.gmra.mrb[0].mxu0 %v102
    %v179 = vpop.f32.mrb[0].mxu0
    %v180 = vadd.f32 0.0, %v179
    %v181 = vpop.f32.mrb[0].mxu0
    %182 = vdwg.mxu0
    %v184 = vsel %vm97, %v59, 0
    %v187 = vsel %vm97, %v60, 0
    %v190 = vsel %vm104, %v94, 0
    %192 = vmatprep.subr.mxu0 0.0
    %193 = vmatpush1.msra.mxu0 %v190
    %194 = vmatprep.subr.mxu0 0.0
    %195 = vmatpush1.msra.mxu0 0.0
    %196 = vmatprep.subr.mxu0 0.0
    %197 = vmatpush1.msra.mxu0 0.0
    %198 = vmatprep.subr.mxu0 0.0
    %199 = vmatpush1.msra.mxu0 0.0
    %200 = vmatprep.subr.mxu0 0.0
    %201 = vmatpush1.msra.mxu0 0.0
    %202 = vmatprep.subr.mxu0 0.0
    %203 = vmatpush1.msra.mxu0 0.0
    %204 = vmatprep.subr.mxu0 0.0
    %205 = vmatpush1.msra.mxu0 0.0
    %206 = vmatprep.subr.mxu0 0.0
    %207 = vmatpush1.msra.mxu0 0.0
    %208 = vmatprep.subr.mxu0 0.0
    %209 = vmatpush1.msra.mxu0 0.0
    %210 = vmatprep.subr.mxu0 0.0
    %211 = vmatpush1.msra.mxu0 0.0
    %212 = vmatprep.subr.mxu0 0.0
    %213 = vmatpush1.msra.mxu0 0.0
    %214 = vmatprep.subr.mxu0 0.0
    %215 = vmatpush1.msra.mxu0 0.0
    %216 = vmatprep.subr.mxu0 0.0
    %217 = vmatpush1.msra.mxu0 0.0
    %218 = vmatprep.subr.mxu0 0.0
    %219 = vmatpush1.msra.mxu0 0.0
    %220 = vmatprep.subr.mxu0 0.0
    %221 = vmatpush1.msra.mxu0 0.0
    %222 = vmatprep.subr.mxu0 0.0
    %223 = vmatpush1.msra.mxu0 0.0
    %224 = vmatprep.subr.mxu0 0.0
    %225 = vmatpush1.msra.mxu0 0.0
    %226 = vmatprep.subr.mxu0 0.0
    %227 = vmatpush1.msra.mxu0 0.0
    %228 = vmatprep.subr.mxu0 0.0
    %229 = vmatpush1.msra.mxu0 0.0
    %230 = vmatprep.subr.mxu0 0.0
    %231 = vmatpush1.msra.mxu0 0.0
    %232 = vmatprep.subr.mxu0 0.0
    %233 = vmatpush1.msra.mxu0 0.0
    %234 = vmatprep.subr.mxu0 0.0
    %235 = vmatpush1.msra.mxu0 0.0
    %236 = vmatprep.subr.mxu0 0.0
    %237 = vmatpush1.msra.mxu0 0.0
    %238 = vmatprep.subr.mxu0 0.0
    %239 = vmatpush1.msra.mxu0 0.0
    %240 = vmatprep.subr.mxu0 0.0
    %241 = vmatpush1.msra.mxu0 0.0
    %242 = vmatprep.subr.mxu0 0.0
    %243 = vmatpush1.msra.mxu0 0.0
    %244 = vmatprep.subr.mxu0 0.0
    %245 = vmatpush1.msra.mxu0 0.0
    %246 = vmatprep.subr.mxu0 0.0
    %247 = vmatpush1.msra.mxu0 0.0
    %248 = vmatprep.subr.mxu0 0.0
    %249 = vmatpush1.msra.mxu0 0.0
    %250 = vmatprep.subr.mxu0 0.0
    %251 = vmatpush1.msra.mxu0 0.0
    %252 = vmatprep.subr.mxu0 0.0
    %253 = vmatpush1.msra.mxu0 0.0
    %254 = vmatprep.subr.mxu0 0.0
    %255 = vmatpush1.msra.mxu0 0.0
    %256 = vmatprep.mubr.f32.mxu0 0.0
    %257 = vmatmul.mubr.f32.gmra.mrb[0].mxu0 %v184
    %v258 = vpop.f32.mrb[0].mxu0
    %v259 = vadd.f32 0.0, %v258
    %v260 = vpop.f32.mrb[0].mxu0
    %261 = vmatprep.mubr.f32.mxu0 0.0
    %262 = vmatmul.mubr.f32.gmra.mrb[0].mxu0 %v187
    %v263 = vpop.f32.mrb[0].mxu0
    %v264 = vadd.f32 0.0, %v263
    %v265 = vpop.f32.mrb[0].mxu0
    %266 = vdwg.mxu0
    %v268 = vsel %vm97, %v61, 0
    %v271 = vsel %vm97, %v62, 0
    %v274 = vsel %vm104, %v95, 0
    %276 = vmatprep.subr.mxu0 0.0
    %277 = vmatpush1.msra.mxu0 %v274
    %278 = vmatprep.subr.mxu0 0.0
    %279 = vmatpush1.msra.mxu0 0.0
    %280 = vmatprep.subr.mxu0 0.0
    %281 = vmatpush1.msra.mxu0 0.0
    %282 = vmatprep.subr.mxu0 0.0
    %283 = vmatpush1.msra.mxu0 0.0
    %284 = vmatprep.subr.mxu0 0.0
    %285 = vmatpush1.msra.mxu0 0.0
    %286 = vmatprep.subr.mxu0 0.0
    %287 = vmatpush1.msra.mxu0 0.0
    %288 = vmatprep.subr.mxu0 0.0
    %289 = vmatpush1.msra.mxu0 0.0
    %290 = vmatprep.subr.mxu0 0.0
    %291 = vmatpush1.msra.mxu0 0.0
    %292 = vmatprep.subr.mxu0 0.0
    %293 = vmatpush1.msra.mxu0 0.0
    %294 = vmatprep.subr.mxu0 0.0
    %295 = vmatpush1.msra.mxu0 0.0
    %296 = vmatprep.subr.mxu0 0.0
    %297 = vmatpush1.msra.mxu0 0.0
    %298 = vmatprep.subr.mxu0 0.0
    %299 = vmatpush1.msra.mxu0 0.0
    %300 = vmatprep.subr.mxu0 0.0
    %301 = vmatpush1.msra.mxu0 0.0
    %302 = vmatprep.subr.mxu0 0.0
    %303 = vmatpush1.msra.mxu0 0.0
    %304 = vmatprep.subr.mxu0 0.0
    %305 = vmatpush1.msra.mxu0 0.0
    %306 = vmatprep.subr.mxu0 0.0
    %307 = vmatpush1.msra.mxu0 0.0
    %308 = vmatprep.subr.mxu0 0.0
    %309 = vmatpush1.msra.mxu0 0.0
    %310 = vmatprep.subr.mxu0 0.0
    %311 = vmatpush1.msra.mxu0 0.0
    %312 = vmatprep.subr.mxu0 0.0
    %313 = vmatpush1.msra.mxu0 0.0
    %314 = vmatprep.subr.mxu0 0.0
    %315 = vmatpush1.msra.mxu0 0.0
    %316 = vmatprep.subr.mxu0 0.0
    %317 = vmatpush1.msra.mxu0 0.0
    %318 = vmatprep.subr.mxu0 0.0
    %319 = vmatpush1.msra.mxu0 0.0
    %320 = vmatprep.subr.mxu0 0.0
    %321 = vmatpush1.msra.mxu0 0.0
    %322 = vmatprep.subr.mxu0 0.0
    %323 = vmatpush1.msra.mxu0 0.0
    %324 = vmatprep.subr.mxu0 0.0
    %325 = vmatpush1.msra.mxu0 0.0
    %326 = vmatprep.subr.mxu0 0.0
    %327 = vmatpush1.msra.mxu0 0.0
    %328 = vmatprep.subr.mxu0 0.0
    %329 = vmatpush1.msra.mxu0 0.0
    %330 = vmatprep.subr.mxu0 0.0
    %331 = vmatpush1.msra.mxu0 0.0
    %332 = vmatprep.subr.mxu0 0.0
    %333 = vmatpush1.msra.mxu0 0.0
    %334 = vmatprep.subr.mxu0 0.0
    %335 = vmatpush1.msra.mxu0 0.0
    %336 = vmatprep.subr.mxu0 0.0
    %337 = vmatpush1.msra.mxu0 0.0
    %338 = vmatprep.subr.mxu0 0.0
    %339 = vmatpush1.msra.mxu0 0.0
    %340 = vmatprep.mubr.f32.mxu0 0.0
    %341 = vmatmul.mubr.f32.gmra.mrb[0].mxu0 %v268
    %v342 = vpop.f32.mrb[0].mxu0
    %v343 = vadd.f32 0.0, %v342
    %v344 = vpop.f32.mrb[0].mxu0
    %345 = vmatprep.mubr.f32.mxu0 0.0
    %346 = vmatmul.mubr.f32.gmra.mrb[0].mxu0 %v271
    %v347 = vpop.f32.mrb[0].mxu0
    %v348 = vadd.f32 0.0, %v347
    %v349 = vpop.f32.mrb[0].mxu0
    %350 = vdwg.mxu0
    %v352 = vsel %vm97, %v63, 0
    %v355 = vsel %vm97, %v64, 0
    %v358 = vsel %vm104, %v96, 0
    %360 = vmatprep.subr.mxu0 0.0
    %361 = vmatpush1.msra.mxu0 %v358
    %362 = vmatprep.subr.mxu0 0.0
    %363 = vmatpush1.msra.mxu0 0.0
    %364 = vmatprep.subr.mxu0 0.0
    %365 = vmatpush1.msra.mxu0 0.0
    %366 = vmatprep.subr.mxu0 0.0
    %367 = vmatpush1.msra.mxu0 0.0
    %368 = vmatprep.subr.mxu0 0.0
    %369 = vmatpush1.msra.mxu0 0.0
    %370 = vmatprep.subr.mxu0 0.0
    %371 = vmatpush1.msra.mxu0 0.0
    %372 = vmatprep.subr.mxu0 0.0
    %373 = vmatpush1.msra.mxu0 0.0
    %374 = vmatprep.subr.mxu0 0.0
    %375 = vmatpush1.msra.mxu0 0.0
    %376 = vmatprep.subr.mxu0 0.0
    %377 = vmatpush1.msra.mxu0 0.0
    %378 = vmatprep.subr.mxu0 0.0
    %379 = vmatpush1.msra.mxu0 0.0
    %380 = vmatprep.subr.mxu0 0.0
    %381 = vmatpush1.msra.mxu0 0.0
    %382 = vmatprep.subr.mxu0 0.0
    %383 = vmatpush1.msra.mxu0 0.0
    %384 = vmatprep.subr.mxu0 0.0
    %385 = vmatpush1.msra.mxu0 0.0
    %386 = vmatprep.subr.mxu0 0.0
    %387 = vmatpush1.msra.mxu0 0.0
    %388 = vmatprep.subr.mxu0 0.0
    %389 = vmatpush1.msra.mxu0 0.0
    %390 = vmatprep.subr.mxu0 0.0
    %391 = vmatpush1.msra.mxu0 0.0
    %392 = vmatprep.subr.mxu0 0.0
    %393 = vmatpush1.msra.mxu0 0.0
    %394 = vmatprep.subr.mxu0 0.0
    %395 = vmatpush1.msra.mxu0 0.0
    %396 = vmatprep.subr.mxu0 0.0
    %397 = vmatpush1.msra.mxu0 0.0
    %398 = vmatprep.subr.mxu0 0.0
    %399 = vmatpush1.msra.mxu0 0.0
    %400 = vmatprep.subr.mxu0 0.0
    %401 = vmatpush1.msra.mxu0 0.0
    %402 = vmatprep.subr.mxu0 0.0
    %403 = vmatpush1.msra.mxu0 0.0
    %404 = vmatprep.subr.mxu0 0.0
    %405 = vmatpush1.msra.mxu0 0.0
    %406 = vmatprep.subr.mxu0 0.0
    %407 = vmatpush1.msra.mxu0 0.0
    %408 = vmatprep.subr.mxu0 0.0
    %409 = vmatpush1.msra.mxu0 0.0
    %410 = vmatprep.subr.mxu0 0.0
    %411 = vmatpush1.msra.mxu0 0.0
    %412 = vmatprep.subr.mxu0 0.0
    %413 = vmatpush1.msra.mxu0 0.0
    %414 = vmatprep.subr.mxu0 0.0
    %415 = vmatpush1.msra.mxu0 0.0
    %416 = vmatprep.subr.mxu0 0.0
    %417 = vmatpush1.msra.mxu0 0.0
    %418 = vmatprep.subr.mxu0 0.0
    %419 = vmatpush1.msra.mxu0 0.0
    %420 = vmatprep.subr.mxu0 0.0
    %421 = vmatpush1.msra.mxu0 0.0
    %422 = vmatprep.subr.mxu0 0.0
    %423 = vmatpush1.msra.mxu0 0.0
    %424 = vmatprep.mubr.f32.mxu0 0.0
    %425 = vmatmul.mubr.f32.gmra.mrb[0].mxu0 %v352
    %v426 = vpop.f32.mrb[0].mxu0
    %v427 = vadd.f32 0.0, %v426
    %v428 = vpop.f32.mrb[0].mxu0
    %429 = vmatprep.mubr.f32.mxu0 0.0
    %430 = vmatmul.mubr.f32.gmra.mrb[0].mxu0 %v355
    %v431 = vpop.f32.mrb[0].mxu0
    %v432 = vadd.f32 0.0, %v431
    %v433 = vpop.f32.mrb[0].mxu0
    %434 = vdwg.mxu0
    %v435 = vmul.f32 %v57, %v57
    %v436 = vmul.f32 %v58, %v58
    %v437 = vmul.f32 %v59, %v59
    %v438 = vmul.f32 %v60, %v60
    %v439 = vmul.f32 %v61, %v61
    %v440 = vmul.f32 %v62, %v62
    %v441 = vmul.f32 %v63, %v63
    %v442 = vmul.f32 %v64, %v64
    %v443 = vsel %vm97, %v435, 0.0
    %444 = vadd.xlane.f32.xlu0 %v443
    %v445 = vpop.xlane.xlu0 %444
    %v446 = vsel %vm97, %v436, 0.0
    %447 = vadd.xlane.f32.xlu0 %v446
    %v448 = vpop.xlane.xlu0 %447
    %v449 = vsel %vm97, %v437, 0.0
    %450 = vadd.xlane.f32.xlu0 %v449
    %v451 = vpop.xlane.xlu0 %450
    %v452 = vsel %vm97, %v438, 0.0
    %453 = vadd.xlane.f32.xlu0 %v452
    %v454 = vpop.xlane.xlu0 %453
    %v455 = vsel %vm97, %v439, 0.0
    %456 = vadd.xlane.f32.xlu0 %v455
    %v457 = vpop.xlane.xlu0 %456
    %v458 = vsel %vm97, %v440, 0.0
    %459 = vadd.xlane.f32.xlu0 %v458
    %v460 = vpop.xlane.xlu0 %459
    %v461 = vsel %vm97, %v441, 0.0
    %462 = vadd.xlane.f32.xlu0 %v461
    %v463 = vpop.xlane.xlu0 %462
    %v464 = vsel %vm97, %v442, 0.0
    %465 = vadd.xlane.f32.xlu0 %v464
    %v466 = vpop.xlane.xlu0 %465
    %v467 = vmul.f32 %v93, %v93
    %v468 = vmul.f32 %v94, %v94
    %v469 = vmul.f32 %v95, %v95
    %v470 = vmul.f32 %v96, %v96
    %vm471 = vcmask 124928
    %v472 = vsel %vm471, %v467, 0.0
    %v473 = vrot.slane %v472, 4
    %v474 = vadd.f32 %v472, %v473
    %v475 = vrot.slane %v474, 2
    %v476 = vadd.f32 %v474, %v475
    %v477 = vrot.slane %v476, 1
    %v478 = vadd.f32 %v476, %v477
    %v479 = vsel %vm471, %v468, 0.0
    %v480 = vrot.slane %v479, 4
    %v481 = vadd.f32 %v479, %v480
    %v482 = vrot.slane %v481, 2
    %v483 = vadd.f32 %v481, %v482
    %v484 = vrot.slane %v483, 1
    %v485 = vadd.f32 %v483, %v484
    %v486 = vsel %vm471, %v469, 0.0
    %v487 = vrot.slane %v486, 4
    %v488 = vadd.f32 %v486, %v487
    %v489 = vrot.slane %v488, 2
    %v490 = vadd.f32 %v488, %v489
    %v491 = vrot.slane %v490, 1
    %v492 = vadd.f32 %v490, %v491
    %v493 = vsel %vm471, %v470, 0.0
    %v494 = vrot.slane %v493, 4
    %v495 = vadd.f32 %v493, %v494
    %v496 = vrot.slane %v495, 2
    %v497 = vadd.f32 %v495, %v496
    %v498 = vrot.slane %v497, 1
    %v499 = vadd.f32 %v497, %v498
    %v500 = vmul.f32 %v445, 0.5
    %v501 = vmul.f32 %v448, 0.5
    %v502 = vmul.f32 %v451, 0.5
    %v503 = vmul.f32 %v454, 0.5
    %v504 = vmul.f32 %v457, 0.5
    %v505 = vmul.f32 %v460, 0.5
    %v506 = vmul.f32 %v463, 0.5
    %v507 = vmul.f32 %v466, 0.5
    %v508 = vsub.f32 %v175, %v500
    %v509 = vsub.f32 %v180, %v501
    %v510 = vsub.f32 %v259, %v502
    %v511 = vsub.f32 %v264, %v503
    %v512 = vsub.f32 %v343, %v504
    %v513 = vsub.f32 %v348, %v505
    %v514 = vsub.f32 %v427, %v506
    %v515 = vsub.f32 %v432, %v507
    %v516 = vmul.f32 %v478, 0.5
    %v517 = vmul.f32 %v485, 0.5
    %v518 = vmul.f32 %v492, 0.5
    %v519 = vmul.f32 %v499, 0.5
    %v520 = vsub.f32 %v508, %v516
    %v521 = vsub.f32 %v509, %v516
    %v522 = vsub.f32 %v510, %v517
    %v523 = vsub.f32 %v511, %v517
    %v524 = vsub.f32 %v512, %v518
    %v525 = vsub.f32 %v513, %v518
    %v526 = vsub.f32 %v514, %v519
    %v527 = vsub.f32 %v515, %v519
    %v528 = vmin.f32 %v520, 0.0
    %v529 = vmin.f32 %v521, 0.0
    %v530 = vmin.f32 %v522, 0.0
    %v531 = vmin.f32 %v523, 0.0
    %v532 = vmin.f32 %v524, 0.0
    %v533 = vmin.f32 %v525, 0.0
    %v534 = vmin.f32 %v526, 0.0
    %v535 = vmin.f32 %v527, 0.0
    %v536 = vld [vmem:[%s2] sm:$0x1]
    %v537 = vld [vmem:[%s2 + $0x1] sm:$0x1]
    %v538 = vld [vmem:[%s2 + $0x2] sm:$0x1]
    %v539 = vld [vmem:[%s2 + $0x3] sm:$0x1]
    %v540 = vmul.f32 %v528, 1.442695
    %v541 = vpow.pop %v540
    %v542 = vmul.f32 %v529, 1.442695
    %v543 = vpow.pop %v542
    %v544 = vmul.f32 %v530, 1.442695
    %v545 = vpow.pop %v544
    %v546 = vmul.f32 %v531, 1.442695
    %v547 = vpow.pop %v546
    %v548 = vmul.f32 %v532, 1.442695
    %v549 = vpow.pop %v548
    %v550 = vmul.f32 %v533, 1.442695
    %v551 = vpow.pop %v550
    %v552 = vmul.f32 %v534, 1.442695
    %v553 = vpow.pop %v552
    %v554 = vmul.f32 %v535, 1.442695
    %v555 = vpow.pop %v554
    %v560 = vlaneseq
    %v561 = vshrl.u32 %v560, 7
    %v562 = vsub.s32 0, %v561
    %v563 = vrot.slane %v536, %v562
    %v564 = vlaneseq
    %v565 = vshrl.u32 %v564, 7
    %v566 = vsub.s32 0, %v565
    %v567 = vrot.slane %v537, %v566
    %v568 = vlaneseq
    %v569 = vshrl.u32 %v568, 7
    %v570 = vsub.s32 0, %v569
    %v571 = vrot.slane %v538, %v570
    %v572 = vlaneseq
    %v573 = vshrl.u32 %v572, 7
    %v574 = vsub.s32 0, %v573
    %v575 = vrot.slane %v539, %v574
    %576 = vset.pattern.permute.xlu0 0
    %577 = vperm.xlu0 %576, %v563
    %v578 = vpop.permute.xlu0 %577
    %580 = vset.pattern.permute.xlu0 0
    %581 = vperm.xlu0 %580, %v567
    %v582 = vpop.permute.xlu0 %581
    %584 = vset.pattern.permute.xlu0 0
    %585 = vperm.xlu0 %584, %v571
    %v586 = vpop.permute.xlu0 %585
    %588 = vset.pattern.permute.xlu0 0
    %589 = vperm.xlu0 %588, %v575
    %v590 = vpop.permute.xlu0 %589
    %v592 = vmul.f32 %v578, %v541
    %v593 = vmul.f32 %v578, %v543
    %v594 = vmul.f32 %v582, %v545
    %v595 = vmul.f32 %v582, %v547
    %v596 = vmul.f32 %v586, %v549
    %v597 = vmul.f32 %v586, %v551
    %v598 = vmul.f32 %v590, %v553
    %v599 = vmul.f32 %v590, %v555
    %vm600 = vcmask 130048
    %601 = vst.msk [vmem:[#allocation2] sm:$0xff] %vm600, %v592
    %602 = vst.msk [vmem:[#allocation2 + $0x8] sm:$0xff] %vm600, %v593
    %603 = vst.msk [vmem:[#allocation2 + $0x10] sm:$0xff] %vm600, %v594
    %604 = vst.msk [vmem:[#allocation2 + $0x18] sm:$0xff] %vm600, %v595
    %605 = vst.msk [vmem:[#allocation2 + $0x20] sm:$0xff] %vm600, %v596
    %606 = vst.msk [vmem:[#allocation2 + $0x28] sm:$0xff] %vm600, %v597
    %607 = vst.msk [vmem:[#allocation2 + $0x30] sm:$0xff] %vm600, %v598
    %608 = vst.msk [vmem:[#allocation2 + $0x38] sm:$0xff] %vm600, %v599
    // Predicated region
    $region22: #{tpu_custom_call.1} parent=1 // pred_check
      _
    $region23: #{tpu_custom_call.1} parent=1 // pred_check_branch
      %610 = sbr.rel (0) target = $region25
    $region24: #{tpu_custom_call.1} parent=1 // pred_region
      %s612 = ssub.s32 1024, 1024
      %613 = vsyncadd [#allocation3], %s612
      %s614 = sshll.u32 [#allocation2], 4
      %s615 = int_to_ptr.vmem [resolvable:$true] %s614
      %620 = dma.vmem_to_hbm [thread:$0]  %s615, 1024, %s5, [#allocation3], 128, 128, 8
    $region25: #{tpu_custom_call.1} parent=1 // pred_fallthru
      _
    // Predicated region
    $region26: #{tpu_custom_call.1} parent=1 // pred_check
      _
    $region27: #{tpu_custom_call.1} parent=1 // pred_check_branch
      %622 = sbr.rel (0) target = $region29
    $region28: #{tpu_custom_call.1} parent=1 // pred_region
      %623 = dma.done [#allocation3], 1024
    $region29: #{tpu_custom_call.1} parent=1 // pred_fallthru
      _
    %624 = vsyncpa [#allocation3], 1

</llo_original>
